<compile_context>
chip_gen: v7x
topology: tpu7x:2x2x1
jax: 0.10.0
libtpu: 0.0.40
codegen_flags: <defaults>
</compile_context>

<pallas_src>
from functools import partial

import jax
import jax.numpy as jnp
from jax import lax
from jax.experimental import pallas as pl
from jax.experimental.pallas import tpu as pltpu


# --------------------------------------------------------------------------- #
# helpers
# --------------------------------------------------------------------------- #
def _cdiv(a, b):
    return -(-a // b)


def _round_up(x, m):
    return _cdiv(x, m) * m


def _vmem_capacity_bytes():
    """Best-effort physical VMEM per TensorCore; falls back to v7x's 64 MiB."""
    try:
        return int(pltpu.get_tpu_info().vmem_capacity_bytes)
    except Exception:
        return 64 * 1024 * 1024


def create_coordinate_matrix(height, width, padded_hw=None):
    """(3, HWp) matrix with rows (x, y, 1), matching torch.meshgrid(..., indexing='xy').

    linspace(0.5/W, 1-0.5/W, W) == (i + 0.5) / W exactly.  Columns past H*W (when
    padded_hw > H*W) are zero so ragged HW chunks contribute nothing.
    """
    xs = (jnp.arange(width, dtype=jnp.float32) + 0.5) / width
    ys = (jnp.arange(height, dtype=jnp.float32) + 0.5) / height
    gx = jnp.broadcast_to(xs[None, :], (height, width)).reshape(-1)
    gy = jnp.broadcast_to(ys[:, None], (height, width)).reshape(-1)
    ones = jnp.ones((height * width,), dtype=jnp.float32)
    g = jnp.stack([gx, gy, ones], axis=0)                       # (3, HW)
    hw = height * width
    if padded_hw is not None and padded_hw > hw:
        g = jnp.pad(g, ((0, 0), (0, padded_hw - hw)))           # tiny (3, pad) constant
    return g


# --------------------------------------------------------------------------- #
# Path A kernel: the whole H*W axis is resident per row tile
# --------------------------------------------------------------------------- #
def _dsnt_kernel_hw_resident(hm_ref, grid_ref, out_ref, *, act, mxu_bf16):
    # hm_ref:   (TR, HW)  raw heatmap logits for TR (batch*channel) rows (native dtype)
    # grid_ref: (3, HW)   augmented coordinate matrix, rows = (x, y, 1)
    # out_ref:  (2, TR)   expected (x, y) per row, lane-dense
    hm = hm_ref[...].astype(jnp.float32)                         # (TR, HW)

    if act == "softmax":
        m = jnp.max(hm, axis=-1, keepdims=True)                  # (TR, 1)
        a = jnp.exp(hm - m)                                      # un-normalized softmax
    elif act == "sigmoid":
        a = jax.nn.sigmoid(hm)
    else:  # identity
        # TODO(synk): matches PyTorch — divides by sum(heatmap) with no epsilon, so
        # zero/negative sums give inf/NaN exactly like the reference module.
        a = hm

    g = grid_ref[...].astype(jnp.float32)                        # (3, HW)
    if mxu_bf16:                                                 # optional VMEM/MXU saver
        a = a.astype(jnp.bfloat16)
        g = g.astype(jnp.bfloat16)

    # (3, HW) x (TR, HW) contracting HW -> (3, TR): rows = (sum x*a, sum y*a, sum a).
    acc = lax.dot_general(g, a, dimension_numbers=(((1,), (1,)), ((), ())),
                          preferred_element_type=jnp.float32)    # (3, TR)
    out_ref[...] = (acc[:2, :] * pl.reciprocal(acc[2:3, :], approx=False)
                    ).astype(out_ref.dtype)


# --------------------------------------------------------------------------- #
# Path B kernel: H*W chunked along a second ("arbitrary") grid axis
# --------------------------------------------------------------------------- #
def _dsnt_kernel_hw_chunked(hm_ref, grid_ref, out_ref, acc_ref, m_ref, *,
                            act, mxu_bf16, hw, tk, ragged_k):
    # hm_ref:   (TR, TK)  heatmap chunk        grid_ref: (3, TK) coordinate chunk
    # out_ref:  (TR, 2)   per-row (x, y)       acc_ref:  (TR, 3) f32 running sums
    # m_ref:    (TR, 1)   running max (softmax only)
    k = pl.program_id(1)
    nk = pl.num_programs(1)

    @pl.when(k == 0)
    def _():
        acc_ref[...] = jnp.zeros_like(acc_ref)
        m_ref[...] = jnp.full_like(m_ref, -jnp.inf)

    hm = hm_ref[...].astype(jnp.float32)                         # (TR, TK)
    g = grid_ref[...].astype(jnp.float32)                        # (3, TK), zero-padded tail

    valid = None
    if ragged_k:
        col = lax.broadcasted_iota(jnp.int32, (1, tk), 1)
        valid = col < (hw - k * tk)                              # (1, TK) lane mask

    if act == "softmax":
        if valid is not None:
            hm = jnp.where(valid, hm, -jnp.inf)                  # keep max & exp exact
        m_old = m_ref[...]
        m_new = jnp.maximum(m_old, jnp.max(hm, axis=-1, keepdims=True))
        p = jnp.exp(hm - m_new)
        acc_ref[...] = acc_ref[...] * jnp.exp(m_old - m_new)     # online (flash) rescale
        m_ref[...] = m_new
    else:
        p = jax.nn.sigmoid(hm) if act == "sigmoid" else hm
        if valid is not None:
            p = jnp.where(valid, p, 0.0)

    if mxu_bf16:
        p = p.astype(jnp.bfloat16)
        g = g.astype(jnp.bfloat16)

    # (TR, TK) x (3, TK) contracting TK -> (TR, 3)
    acc_ref[...] += lax.dot_general(p, g, dimension_numbers=(((1,), (1,)), ((), ())),
                                    preferred_element_type=jnp.float32)

    @pl.when(k == nk - 1)
    def _():
        out_ref[...] = (acc_ref[:, :2] * pl.reciprocal(acc_ref[:, 2:3], approx=False)
                        ).astype(out_ref.dtype)


# --------------------------------------------------------------------------- #
# wrapper
# --------------------------------------------------------------------------- #
def dsnt2d(heatmap, act="sigmoid", *, vmem_limit_bytes=None, tile_budget_bytes=None,
           mxu_bf16=False):
    """
    Args:
        heatmap: (N, C, H, W) raw logits, any float dtype (streamed in native dtype).
    Returns:
        (N, C, 2) expected normalized (x, y) coordinates in [0, 1], always float32
        (coordinates are not quantized back to bf16).
    """
    assert act in ("sigmoid", "identity", "softmax")
    B, C, H, W = heatmap.shape
    R, HW = B * C, H * W
    hm2 = heatmap.reshape(R, HW)                  # free reshape of contiguous NCHW
    itemsize = jnp.dtype(heatmap.dtype).itemsize
    out_dtype = jnp.float32

    # Per-chip VMEM-aware sizing.  The working set per row is: double-buffered
    # native-dtype input tile + ~two materialized f32 temporaries (upcast + activation).
    cap = _vmem_capacity_bytes()
    if vmem_limit_bytes is None:
        vmem_limit_bytes = max(32 << 20, min((5 * cap) // 8, 88 << 20))
    if tile_budget_bytes is None:
        tile_budget_bytes = max(16 << 20, min((3 * cap) // 8, 56 << 20))
    tile_budget_bytes = min(tile_budget_bytes, vmem_limit_bytes - (4 << 20))
    bytes_per_row = HW * (2 * itemsize + 8)

    min_tr = R if R <= 128 else 128
    use_chunked = (HW > 256) and (bytes_per_row * min_tr > tile_budget_bytes)

    if not use_chunked:
        # ------------------------- Path A: HW resident ------------------------- #
        tr_budget = max(min_tr, tile_budget_bytes // bytes_per_row)
        if R <= tr_budget and R < 256:
            TR = R                                           # single exact row tile
        else:
            # Multi-tile: TR must be a multiple of 128 (lane dim of the (2,TR) output).
            cap_tr = max(128, (tr_budget // 128) * 128)
            # Force >= 2 row tiles when R >= 256 so v7x's 2 TensorCores both get work.
            want = _round_up(_cdiv(R, 2), 128) if R >= 256 else cap_tr
            TR = max(128, min(cap_tr, want))
        n_tiles = _cdiv(R, TR)
        grid3 = create_coordinate_matrix(H, W)               # (3, HW) f32 constant

        out = pl.pallas_call(
            partial(_dsnt_kernel_hw_resident, act=act, mxu_bf16=mxu_bf16),
            out_shape=jax.ShapeDtypeStruct((2, R), out_dtype),
            grid=(n_tiles,),
            in_specs=[
                pl.BlockSpec((TR, HW), lambda i: (i, 0)),
                pl.BlockSpec((3, HW), lambda i: (0, 0)),
            ],
            out_specs=pl.BlockSpec((2, TR), lambda i: (0, i)),
            compiler_params=pltpu.CompilerParams(
                dimension_semantics=("parallel",),
                vmem_limit_bytes=int(vmem_limit_bytes)),
        )(hm2, grid3)
        xy = out.T.reshape(B, C, 2)                          # tiny (2,R) transpose
    else:
        # ----------------------- Path B: HW chunked (large H*W) ----------------- #
        if R <= 128:
            TR = R
        else:
            TR = max(128, min(512, _round_up(_cdiv(R, 2), 8)))
        n_row_tiles = _cdiv(R, TR)
        col_bytes = TR * (2 * itemsize + 8)
        TK = max(128, (tile_budget_bytes // col_bytes) // 128 * 128)
        nk = _cdiv(HW, TK)
        ragged_k = (HW % TK) != 0
        grid3 = create_coordinate_matrix(H, W, padded_hw=nk * TK)   # zero-padded tail

        out = pl.pallas_call(
            partial(_dsnt_kernel_hw_chunked, act=act, mxu_bf16=mxu_bf16,
                    hw=HW, tk=TK, ragged_k=ragged_k),
            out_shape=jax.ShapeDtypeStruct((R, 2), out_dtype),
            grid=(n_row_tiles, nk),
            in_specs=[
                pl.BlockSpec((TR, TK), lambda i, k: (i, k)),
                pl.BlockSpec((3, TK), lambda i, k: (0, k)),
            ],
            out_specs=pl.BlockSpec((TR, 2), lambda i, k: (i, 0)),
            scratch_shapes=[
                pltpu.VMEM((TR, 3), jnp.float32),            # running (sum x*a, y*a, a)
                pltpu.VMEM((TR, 1), jnp.float32),            # running max (softmax)
            ],
            compiler_params=pltpu.CompilerParams(
                dimension_semantics=("parallel", "arbitrary"),
                vmem_limit_bytes=int(vmem_limit_bytes)),
        )(hm2, grid3)
        xy = out.reshape(B, C, 2)

    return xy


# --------------------------------------------------------------------------- #
# pure-JAX reference (mirrors the PyTorch forward)
# --------------------------------------------------------------------------- #
def _dsnt2d_ref(heatmap, act="sigmoid"):
    B, C, H, W = heatmap.shape
    heatmap = heatmap.astype(jnp.float32)
    g3 = create_coordinate_matrix(H, W)
    grid = jnp.stack([g3[0].reshape(H, W), g3[1].reshape(H, W)], axis=-1)  # (H, W, 2)
    if act != "softmax":
        a = jax.nn.sigmoid(heatmap) if act == "sigmoid" else heatmap
        prob = a / jnp.sum(a, axis=(2, 3), keepdims=True)
    else:
        flat = heatmap.reshape(B, C, H * W)
        prob = jax.nn.softmax(flat, axis=-1).reshape(B, C, H, W)
    return jnp.sum(grid[None, None] * prob[..., None], axis=(2, 3))


if __name__ == "__main__":
    key = jax.random.PRNGKey(0)
    k0, k1, k2, k3, k4, k5 = jax.random.split(key, 6)

    # 1) Main shapes implied by the module: (N, C, H, W) = (2, 4, 16, 16).
    x = jax.random.normal(k0, (2, 4, 16, 16), dtype=jnp.float32)
    for act in ("sigmoid", "softmax"):
        out = jax.block_until_ready(dsnt2d(x, act=act))
        ref = _dsnt2d_ref(x, act=act)
        assert out.shape == (2, 4, 2)
        assert jnp.allclose(out, ref, atol=1e-5, rtol=1e-5), f"mismatch for act={act}"

    # 2) Identity activation (positive input so the reference divide is finite).
    xp = jnp.abs(jax.random.normal(k1, (2, 4, 16, 16), jnp.float32)) + 0.1
    out = jax.block_until_ready(dsnt2d(xp, act="identity"))
    assert jnp.allclose(out, _dsnt2d_ref(xp, act="identity"), atol=1e-5, rtol=1e-5)

    # 3) bf16 heatmap streamed in native dtype (half the HBM bytes); f32 math in-kernel.
    xb = jax.random.normal(k2, (2, 4, 16, 16), jnp.float32).astype(jnp.bfloat16)
    out = jax.block_until_ready(dsnt2d(xb, act="sigmoid"))
    assert jnp.allclose(out, _dsnt2d_ref(xb, act="sigmoid"), atol=1e-4, rtol=1e-4)

    # 4) Multi row-tile Path A with a ragged last tile (no wrapper padding copy).
    x4 = jax.random.normal(k3, (4, 70, 16, 16), jnp.float32)   # R = 280 -> 2 tiles of 256
    out = jax.block_until_ready(dsnt2d(x4, act="sigmoid"))
    assert jnp.allclose(out, _dsnt2d_ref(x4, act="sigmoid"), atol=1e-5, rtol=1e-5)

    # 5) Path B (HW-chunked) with a ragged last HW chunk, forced via a tiny tile budget.
    x5 = jax.random.normal(k4, (2, 4, 64, 60), jnp.float32)    # HW = 3840
    for act in ("softmax", "sigmoid"):
        out = jax.block_until_ready(dsnt2d(x5, act=act, tile_budget_bytes=64 * 1024))
        assert jnp.allclose(out, _dsnt2d_ref(x5, act=act), atol=1e-5, rtol=1e-5), act

    # 6) Path B with ragged row tiles + online softmax rescale across many HW chunks.
    x6 = jax.random.normal(k5, (2, 130, 32, 32), jnp.float32)  # R = 260, HW = 1024
    out = jax.block_until_ready(dsnt2d(x6, act="softmax", tile_budget_bytes=256 * 1024))
    assert jnp.allclose(out, _dsnt2d_ref(x6, act="softmax"), atol=1e-5, rtol=1e-5)

    # 7) Odd row count (R = 5): single full-extent tile, no padding needed.
    x7 = jax.random.normal(jax.random.PRNGKey(1), (1, 5, 16, 16), jnp.float32)
    out = jax.block_until_ready(dsnt2d(x7, act="softmax"))
    assert jnp.allclose(out, _dsnt2d_ref(x7, act="softmax"), atol=1e-5, rtol=1e-5)

    # 8) Optional bf16 MXU-operand path (halves the VMEM intermediate; looser tol).
    out = jax.block_until_ready(dsnt2d(x, act="softmax", mxu_bf16=True))
    assert jnp.allclose(out, _dsnt2d_ref(x, act="softmax"), atol=5e-3, rtol=1e-2)

    print("KERNEL_OK")
</pallas_src>

<mosaic_0001>
module attributes {stable_mosaic.version = 11 : i64} {
  func.func @_dsnt_kernel_hw_resident(%arg0: i32, %arg1: memref<8x256xf32, #tpu.memory_space<vmem>>, %arg2: memref<3x256xf32, #tpu.memory_space<vmem>>, %arg3: memref<2x8xf32, #tpu.memory_space<vmem>>) attributes {dimension_semantics = [#tpu.dimension_semantics<parallel>], iteration_bounds = array<i64: 1>, scalar_prefetch = 0 : i64, scratch_operands = 0 : i64, tpu.core_type = #tpu.core_type<tc>, window_params = [{transform_indices = @transform_0, window_bounds = array<i64: 8, 256>}, {pipeline_mode = #tpu.pipeline_mode<synchronous>, transform_indices = @transform_1, window_bounds = array<i64: 3, 256>}, {transform_indices = @transform_2, window_bounds = array<i64: 2, 8>}]} {
    %c0 = arith.constant 0 : index
    %c0_0 = arith.constant 0 : index
    %0 = vector.load %arg1[%c0, %c0_0] : memref<8x256xf32, #tpu.memory_space<vmem>>, vector<8x256xf32>
    %1 = arith.negf %0 : vector<8x256xf32>
    %2 = math.exp %1 : vector<8x256xf32>
    %cst = arith.constant 1.000000e+00 : f32
    %3 = vector.broadcast %cst : f32 to vector<8x256xf32>
    %4 = arith.addf %3, %2 : vector<8x256xf32>
    %5 = arith.divf %3, %4 : vector<8x256xf32>
    %c0_1 = arith.constant 0 : index
    %c0_2 = arith.constant 0 : index
    %6 = vector.load %arg2[%c0_1, %c0_2] : memref<3x256xf32, #tpu.memory_space<vmem>>, vector<3x256xf32>
    %cst_3 = arith.constant dense<0.000000e+00> : vector<3x8xf32>
    %7 = tpu.matmul %6, %5, %cst_3 {dimension_numbers = #tpu.dot_dimension_numbers<[1], [1], [0], [0], [0, 0, 1, 0], [], []>} : vector<3x256xf32>, vector<8x256xf32>, vector<3x8xf32> -> vector<3x8xf32>
    %8 = vector.extract_strided_slice %7 {offsets = [0, 0], sizes = [2, 8], strides = [1, 1]} : vector<3x8xf32> to vector<2x8xf32>
    %9 = vector.extract_strided_slice %7 {offsets = [2, 0], sizes = [1, 8], strides = [1, 1]} : vector<3x8xf32> to vector<1x8xf32>
    %10 = tpu.reciprocal %9 : vector<1x8xf32> -> vector<1x8xf32>
    %11 = vector.broadcast %10 : vector<1x8xf32> to vector<2x8xf32>
    %12 = arith.mulf %8, %11 : vector<2x8xf32>
    %c0_4 = arith.constant 0 : index
    %c0_5 = arith.constant 0 : index
    %13 = vector.load %arg3[%c0_4, %c0_5] : memref<2x8xf32, #tpu.memory_space<vmem>>, vector<2x8xf32>
    tpu.vector_store %arg3[%c0_4, %c0_5], %12 {strides = array<i32>} : memref<2x8xf32, #tpu.memory_space<vmem>>, vector<2x8xf32>,
    return
  }
  func.func @transform_0(%arg0: i32) -> (i32, i32) {
    %c0_i32 = arith.constant 0 : i32
    %c0_i32_0 = arith.constant 0 : i32
    return %arg0, %c0_i32 : i32, i32
  }
  func.func @transform_1(%arg0: i32) -> (i32, i32) {
    %c0_i32 = arith.constant 0 : i32
    %c0_i32_0 = arith.constant 0 : i32
    %c0_i32_1 = arith.constant 0 : i32
    return %c0_i32, %c0_i32_0 : i32, i32
  }
  func.func @transform_2(%arg0: i32) -> (i32, i32) {
    %c0_i32 = arith.constant 0 : i32
    %c0_i32_0 = arith.constant 0 : i32
    return %c0_i32, %arg0 : i32, i32
  }
}

</mosaic_0001>

<llo_original>
// kernel: tpu_custom_call.1
$region0: #{tpu_custom_call.1}
  #allocation0 [shape = 'u32[]', space=smem, size = 0x4, offset = 0x4, fixed_abs, tag = 'smem constant byte address 0x4 - core index']
  #allocation1 [shape = 'u32[144,128]{1,0:T(1,128)}', space=vmem, size = 0x12000, scoped, tag = 'internal scratch']
  %s0 = inlined_call_operand.hbm [shape: f32[8,256], index: 0, kind: input, shape index: {}]
  %s1 = inlined_call_operand.hbm [shape: f32[3,256], index: 1, kind: input, shape index: {}]
  %s2 = inlined_call_operand.hbm [shape: f32[2,8], index: 2, kind: output, shape index: {}]
  %s3 = sld [smem:[#allocation0]]
  $region26: #{tpu_custom_call.1} parent=0
    _
  %s5 = ssub.s32 1, %s3
  %s6 = scalar_select 0, %s5, %s3
  $region1: #{tpu_custom_call.1} parent=0
    #allocation2 [shape = 'u8[8192]{0}', space=vmem, size = 0x2000, scoped, tag = 'input window, operand 0, single buffered']
    #allocation3 [shape = 's32[1]{0}', space=sflag, size = 0x4, scoped, tag = 'scoped memory for tpu_custom_call.1']
    #allocation4 [shape = 's32[1]{0}', space=sflag, size = 0x4, scoped, tag = 'scoped memory for tpu_custom_call.1']
    #allocation5 [shape = 'u8[4096]{0}', space=vmem, size = 0x1000, scoped, tag = 'input window, operand 1, single buffered']
    #allocation6 [shape = 's32[1]{0}', space=sflag, size = 0x4, scoped, tag = 'scoped memory for tpu_custom_call.1']
    #allocation7 [shape = 'u8[1024]{0}', space=vmem, size = 0x400, scoped, tag = 'output window, operand 0, single buffered']
    %7 = vsyncpa [#allocation3], 0
    %8 = vsyncpa [#allocation6], 0
    %9 = vsyncpa [#allocation4], 0
    // Predicated region
    $region2: #{tpu_custom_call.1} parent=1 // pred_check
      _
    $region3: #{tpu_custom_call.1} parent=1 // pred_check_branch
      %11 = sbr.rel (0) target = $region5
    $region4: #{tpu_custom_call.1} parent=1 // pred_region
      %s13 = ssub.s32 256, 256
      %14 = vsyncadd [#allocation3], %s13
      %s16 = sshll.u32 [#allocation2], 4
      %s17 = int_to_ptr.vmem [resolvable:$true] %s16
      %19 = dma.hbm_to_vmem [thread:$0]  %s0, 256, %s17, [#allocation3]
    $region5: #{tpu_custom_call.1} parent=1 // pred_fallthru
      _
    // Predicated region
    $region6: #{tpu_custom_call.1} parent=1 // pred_check
      _
    $region7: #{tpu_custom_call.1} parent=1 // pred_check_branch
      %21 = sbr.rel (0) target = $region9
    $region8: #{tpu_custom_call.1} parent=1 // pred_region
      %s23 = ssub.s32 128, 128
      %24 = vsyncadd [#allocation6], %s23
      %s26 = sshll.u32 [#allocation5], 4
      %s27 = int_to_ptr.vmem [resolvable:$true] %s26
      %29 = dma.hbm_to_vmem [thread:$0]  %s1, 128, %s27, [#allocation6]
    $region9: #{tpu_custom_call.1} parent=1 // pred_fallthru
      _
    // Predicated region
    $region10: #{tpu_custom_call.1} parent=1 // pred_check
      _
    $region11: #{tpu_custom_call.1} parent=1 // pred_check_branch
      %31 = sbr.rel (0) target = $region13
    $region12: #{tpu_custom_call.1} parent=1 // pred_region
      %32 = dma.done [#allocation3], 256
    $region13: #{tpu_custom_call.1} parent=1 // pred_fallthru
      _
    // Predicated region
    $region14: #{tpu_custom_call.1} parent=1 // pred_check
      _
    $region15: #{tpu_custom_call.1} parent=1 // pred_check_branch
      %34 = sbr.rel (0) target = $region17
    $region16: #{tpu_custom_call.1} parent=1 // pred_region
      %35 = dma.done [#allocation6], 128
    $region17: #{tpu_custom_call.1} parent=1 // pred_fallthru
      _
    %v36 = vld [vmem:[#allocation2] sm:$0xff]
    %v37 = vld [vmem:[#allocation2 + $0x8] sm:$0xff]
    %v38 = vxor.u32 %v36, 2147483648
    %v39 = vxor.u32 %v37, 2147483648
    %v40 = vmul.f32 %v38, 1.442695
    %v41 = vpow.pop %v40
    %v42 = vmul.f32 %v39, 1.442695
    %v43 = vpow.pop %v42
    %v44 = vadd.f32 %v41, 1.0
    %v45 = vadd.f32 %v43, 1.0
    %v46 = vrcp.pop %v44
    %v47 = vmul.f32 1.0, %v46
    %v48 = vrcp.pop %v45
    %v49 = vmul.f32 1.0, %v48
    %v50 = vld [vmem:[#allocation5] sm:$0x77]
    %v52 = vcombine.high %v50, %v50
    %54 = vmatprep.subr.mxu0 %v49
    %55 = vmatpush1.xpose.msra.mxu0 %v47
    %56 = vmatprep.subr.mxu0 0.0
    %57 = vmatpush1.xpose.msra.mxu0 0.0
    %58 = vmatprep.subr.mxu0 0.0
    %59 = vmatpush1.xpose.msra.mxu0 0.0
    %60 = vmatprep.subr.mxu0 0.0
    %61 = vmatpush1.xpose.msra.mxu0 0.0
    %62 = vmatprep.subr.mxu0 0.0
    %63 = vmatpush1.xpose.msra.mxu0 0.0
    %64 = vmatprep.subr.mxu0 0.0
    %65 = vmatpush1.xpose.msra.mxu0 0.0
    %66 = vmatprep.subr.mxu0 0.0
    %67 = vmatpush1.xpose.msra.mxu0 0.0
    %68 = vmatprep.subr.mxu0 0.0
    %69 = vmatpush1.xpose.msra.mxu0 0.0
    %70 = vmatprep.subr.mxu0 0.0
    %71 = vmatpush1.xpose.msra.mxu0 0.0
    %72 = vmatprep.subr.mxu0 0.0
    %73 = vmatpush1.xpose.msra.mxu0 0.0
    %74 = vmatprep.subr.mxu0 0.0
    %75 = vmatpush1.xpose.msra.mxu0 0.0
    %76 = vmatprep.subr.mxu0 0.0
    %77 = vmatpush1.xpose.msra.mxu0 0.0
    %78 = vmatprep.subr.mxu0 0.0
    %79 = vmatpush1.xpose.msra.mxu0 0.0
    %80 = vmatprep.subr.mxu0 0.0
    %81 = vmatpush1.xpose.msra.mxu0 0.0
    %82 = vmatprep.subr.mxu0 0.0
    %83 = vmatpush1.xpose.msra.mxu0 0.0
    %84 = vmatprep.subr.mxu0 0.0
    %85 = vmatpush1.xpose.msra.mxu0 0.0
    %86 = vmatprep.subr.mxu0 0.0
    %87 = vmatpush1.xpose.msra.mxu0 0.0
    %88 = vmatprep.subr.mxu0 0.0
    %89 = vmatpush1.xpose.msra.mxu0 0.0
    %90 = vmatprep.subr.mxu0 0.0
    %91 = vmatpush1.xpose.msra.mxu0 0.0
    %92 = vmatprep.subr.mxu0 0.0
    %93 = vmatpush1.xpose.msra.mxu0 0.0
    %94 = vmatprep.subr.mxu0 0.0
    %95 = vmatpush1.xpose.msra.mxu0 0.0
    %96 = vmatprep.subr.mxu0 0.0
    %97 = vmatpush1.xpose.msra.mxu0 0.0
    %98 = vmatprep.subr.mxu0 0.0
    %99 = vmatpush1.xpose.msra.mxu0 0.0
    %100 = vmatprep.subr.mxu0 0.0
    %101 = vmatpush1.xpose.msra.mxu0 0.0
    %102 = vmatprep.subr.mxu0 0.0
    %103 = vmatpush1.xpose.msra.mxu0 0.0
    %104 = vmatprep.subr.mxu0 0.0
    %105 = vmatpush1.xpose.msra.mxu0 0.0
    %106 = vmatprep.subr.mxu0 0.0
    %107 = vmatpush1.xpose.msra.mxu0 0.0
    %108 = vmatprep.subr.mxu0 0.0
    %109 = vmatpush1.xpose.msra.mxu0 0.0
    %110 = vmatprep.subr.mxu0 0.0
    %111 = vmatpush1.xpose.msra.mxu0 0.0
    %112 = vmatprep.subr.mxu0 0.0
    %113 = vmatpush1.xpose.msra.mxu0 0.0
    %114 = vmatprep.subr.mxu0 0.0
    %115 = vmatpush1.xpose.msra.mxu0 0.0
    %116 = vmatprep.subr.mxu0 0.0
    %117 = vmatpush1.xpose.msra.mxu0 0.0
    %118 = vmatprep.mubr.f32.mxu0 %v52
    %119 = vmatmul.mubr.f32.gmra.mrb[0].mxu0 %v50
    %v120 = vpop.f32.mrb[0].mxu0
    %v121 = vadd.f32 0.0, %v120
    %v122 = vpop.f32.mrb[0].mxu0
    %123 = vdwg.mxu0
    %v124 = vrcp.pop %v121
    %v125 = vlaneseq
    %v126 = vshrl.u32 %v125, 7
    %v127 = vsub.s32 2, %v126
    %v128 = vrot.slane %v124, %v127
    %v129 = vmul.f32 %v121, %v128
    %vm130 = vcmask 58368
    %131 = vst.msk [vmem:[#allocation7] sm:$0x3] %vm130, %v129
    // Predicated region
    $region18: #{tpu_custom_call.1} parent=1 // pred_check
      _
    $region19: #{tpu_custom_call.1} parent=1 // pred_check_branch
      %133 = sbr.rel (0) target = $region21
    $region20: #{tpu_custom_call.1} parent=1 // pred_region
      %s135 = ssub.s32 32, 32
      %136 = vsyncadd [#allocation4], %s135
      %s138 = sshll.u32 [#allocation7], 4
      %s139 = int_to_ptr.vmem [resolvable:$true] %s138
      %141 = dma.vmem_to_hbm [thread:$0]  %s139, 32, %s2, [#allocation4]
    $region21: #{tpu_custom_call.1} parent=1 // pred_fallthru
      _
    // Predicated region
    $region22: #{tpu_custom_call.1} parent=1 // pred_check
      _
    $region23: #{tpu_custom_call.1} parent=1 // pred_check_branch
      %143 = sbr.rel (0) target = $region25
    $region24: #{tpu_custom_call.1} parent=1 // pred_region
      %144 = dma.done [#allocation4], 32
    $region25: #{tpu_custom_call.1} parent=1 // pred_fallthru
      _
    %145 = vsyncpa [#allocation3], 1
    %146 = vsyncpa [#allocation6], 1
    %147 = vsyncpa [#allocation4], 1

</llo_original>
